<compile_context>
chip_gen: v7x
topology: tpu7x:2x2x1
jax: 0.10.0
libtpu: 0.0.40
codegen_flags: <defaults>
</compile_context>

<pallas_src>
import functools

import jax
import jax.numpy as jnp
from jax.experimental import pallas as pl
from jax.experimental.pallas import tpu as pltpu


def _stddev_kernel(x_ref, o_ref, *, num_new_features):
    """One grid step handles one within-group index m.

    x_ref: (G, C, N)      -- the G group members for this m
    o_ref: (G, C + F, N)  -- pass-through channels + stddev feature channels
    """
    G, C, N = x_ref.shape
    F = num_new_features
    Cf = C // F

    x = x_ref[...]

    # Pass-through copy of the original channels (lane-dense, aligned store).
    o_ref[:, :C, :] = x

    # Group statistics in f32 (matches torch: biased variance, +1e-8, sqrt).
    x32 = x.astype(jnp.float32)
    mean = jnp.mean(x32, axis=0, keepdims=True)      # (1, C, N)
    var = jnp.mean((x32 - mean) ** 2, axis=0)        # (C, N)
    std = jnp.sqrt(var + 1e-8)                       # (C, N)

    # One scalar per new feature f: mean of std over its channel slice and N.
    # F is a small static Python int, so this unrolls into static slices
    # (no broadcasted_iota / compare / select on the VPU path).
    for f in range(F):
        std_f = std[f * Cf:(f + 1) * Cf, :]          # (Cf, N), static slice
        feat = jnp.mean(std_f)                       # scalar
        o_ref[:, C + f:C + f + 1, :] = jnp.full((G, 1, N), feat, dtype=o_ref.dtype)


def stddev_layer_forward(x, *, group_size=4, num_new_features=1):
    """x: (B, C, N) -> (B, C + num_new_features, N)."""
    B, C, N = x.shape
    G = min(group_size, B)
    F = num_new_features
    assert B % G == 0, "batch must be divisible by the (clamped) group size"
    assert C % F == 0, "channels must be divisible by num_new_features"
    M = B // G

    # Split the batch exactly like torch's reshape: b = g * M + m.
    xg = x.reshape(G, M, C, N)

    kernel = functools.partial(_stddev_kernel, num_new_features=F)

    out = pl.pallas_call(
        kernel,
        out_shape=jax.ShapeDtypeStruct((G, M, C + F, N), x.dtype),
        grid_spec=pltpu.PrefetchScalarGridSpec(
            num_scalar_prefetch=0,
            # One grid step per independent statistics group m; each step moves
            # one full (G, C, N) slab instead of per-batch-element tiles.
            grid=(M,),
            in_specs=[pl.BlockSpec((G, None, C, N), lambda m: (0, m, 0, 0))],
            out_specs=pl.BlockSpec((G, None, C + F, N), lambda m: (0, m, 0, 0)),
        ),
        compiler_params=pltpu.CompilerParams(
            # Independent groups -> shard across TensorCores on v7x.
            dimension_semantics=("parallel",),
        ),
    )(xg)

    # TODO(synk): for production-sized C*N, additionally tile the N axis
    # (two-pass mean) to respect the v7x 32 MiB scoped-VMEM default.
    return out.reshape(B, C + F, N)


def stddev_layer_ref(x, *, group_size=4, num_new_features=1):
    """Pure-JAX reference mirroring the PyTorch forward."""
    B, C, N = x.shape
    G = min(group_size, B)
    M = B // G
    F = num_new_features
    y = x.reshape(G, M, F, C // F, N)
    y = y - jnp.mean(y, axis=0, keepdims=True)
    y = jnp.mean(y ** 2, axis=0, keepdims=True)
    y = jnp.sqrt(y + 1e-8)
    y = jnp.mean(y, axis=(3, 4), keepdims=True)      # (1, M, F, 1, 1)
    y = jnp.broadcast_to(y[:, :, :, 0, :], (G, M, F, N)).reshape(B, F, N)
    return jnp.concatenate([x, y.astype(x.dtype)], axis=1)


if __name__ == "__main__":
    key = jax.random.PRNGKey(0)
    k1, k2 = jax.random.split(key)

    # Primary test: a real group structure (G=4, M=2).
    B, C, N = 8, 16, 128
    group_size, num_new_features = 4, 1
    x = jax.random.normal(k1, (B, C, N), dtype=jnp.float32)

    out = stddev_layer_forward(x, group_size=group_size,
                               num_new_features=num_new_features)
    out = jax.block_until_ready(out)
    ref = stddev_layer_ref(x, group_size=group_size,
                           num_new_features=num_new_features)
    assert out.shape == (B, C + num_new_features, N)
    assert jnp.allclose(out, ref, atol=1e-5, rtol=1e-5)

    # Sanity check at the literal spec shape (B=1 -> degenerate group of 1).
    x1 = jax.random.normal(k2, (1, 16, 128), dtype=jnp.float32)
    out1 = jax.block_until_ready(stddev_layer_forward(x1, group_size=4,
                                                      num_new_features=1))
    ref1 = stddev_layer_ref(x1, group_size=4, num_new_features=1)
    assert out1.shape == (1, 17, 128)
    assert jnp.allclose(out1, ref1, atol=1e-5, rtol=1e-5)

    print("KERNEL_OK")
</pallas_src>

<mosaic_0001>
module attributes {stable_mosaic.version = 11 : i64} {
  func.func @_stddev_kernel(%arg0: i32, %arg1: memref<4x1x16x128xf32, #tpu.memory_space<vmem>>, %arg2: memref<4x1x17x128xf32, #tpu.memory_space<vmem>>) attributes {dimension_semantics = [#tpu.dimension_semantics<parallel>], iteration_bounds = array<i64: 2>, scalar_prefetch = 0 : i64, scratch_operands = 0 : i64, tpu.core_type = #tpu.core_type<tc>, window_params = [{transform_indices = @transform_0, window_bounds = array<i64: 4, 1, 16, 128>}, {transform_indices = @transform_1, window_bounds = array<i64: 4, 1, 17, 128>}]} {
    %c0 = arith.constant 0 : index
    %c0_0 = arith.constant 0 : index
    %c0_1 = arith.constant 0 : index
    %c0_2 = arith.constant 0 : index
    %0 = vector.load %arg1[%c0, %c0_0, %c0_1, %c0_2] : memref<4x1x16x128xf32, #tpu.memory_space<vmem>>, vector<4x1x16x128xf32>
    %1 = vector.shape_cast %0 : vector<4x1x16x128xf32> to vector<4x16x128xf32>
    %c0_3 = arith.constant 0 : index
    %c0_4 = arith.constant 0 : index
    %c0_5 = arith.constant 0 : index
    %c0_6 = arith.constant 0 : index
    %2 = vector.load %arg2[%c0_3, %c0_4, %c0_5, %c0_6] : memref<4x1x17x128xf32, #tpu.memory_space<vmem>>, vector<4x1x16x128xf32>
    %3 = vector.shape_cast %2 : vector<4x1x16x128xf32> to vector<4x16x128xf32>
    %4 = vector.shape_cast %1 : vector<4x16x128xf32> to vector<4x1x16x128xf32>
    tpu.vector_store %arg2[%c0_3, %c0_4, %c0_5, %c0_6], %4 {strides = array<i32>} : memref<4x1x17x128xf32, #tpu.memory_space<vmem>>, vector<4x1x16x128xf32>,
    %cst = arith.constant dense<0.000000e+00> : vector<16x128xf32>
    %5 = vector.multi_reduction <add>, %1, %cst [0] : vector<4x16x128xf32> to vector<16x128xf32>
    %6 = vector.shape_cast %5 : vector<16x128xf32> to vector<1x16x128xf32>
    %cst_7 = arith.constant 4.000000e+00 : f32
    %7 = vector.broadcast %cst_7 : f32 to vector<1x16x128xf32>
    %8 = arith.divf %6, %7 : vector<1x16x128xf32>
    %9 = vector.broadcast %8 : vector<1x16x128xf32> to vector<4x16x128xf32>
    %10 = arith.subf %1, %9 : vector<4x16x128xf32>
    %11 = arith.mulf %10, %10 : vector<4x16x128xf32>
    %cst_8 = arith.constant dense<0.000000e+00> : vector<16x128xf32>
    %12 = vector.multi_reduction <add>, %11, %cst_8 [0] : vector<4x16x128xf32> to vector<16x128xf32>
    %cst_9 = arith.constant 4.000000e+00 : f32
    %13 = vector.broadcast %cst_9 : f32 to vector<16x128xf32>
    %14 = arith.divf %12, %13 : vector<16x128xf32>
    %cst_10 = arith.constant 9.99999993E-9 : f32
    %15 = vector.broadcast %cst_10 : f32 to vector<16x128xf32>
    %16 = arith.addf %14, %15 : vector<16x128xf32>
    %17 = math.sqrt %16 : vector<16x128xf32>
    %18 = vector.shape_cast %17 : vector<16x128xf32> to vector<1x16x128xf32>
    %cst_11 = arith.constant dense<0.000000e+00> : vector<1xf32>
    %19 = vector.multi_reduction <add>, %18, %cst_11 [1, 2] : vector<1x16x128xf32> to vector<1xf32>
    %20 = vector.shape_cast %19 : vector<1xf32> to vector<1x1x1xf32>
    %21 = vector.extract %20[0, 0, 0] : f32 from vector<1x1x1xf32>
    %cst_12 = arith.constant 2.048000e+03 : f32
    %22 = arith.divf %21, %cst_12 : f32
    %23 = vector.broadcast %22 : f32 to vector<4x1x128xf32>
    %c0_13 = arith.constant 0 : index
    %c0_14 = arith.constant 0 : index
    %c16 = arith.constant 16 : index
    %c0_15 = arith.constant 0 : index
    %24 = vector.load %arg2[%c0_13, %c0_14, %c16, %c0_15] : memref<4x1x17x128xf32, #tpu.memory_space<vmem>>, vector<4x1x1x128xf32>
    %25 = vector.shape_cast %24 : vector<4x1x1x128xf32> to vector<4x1x128xf32>
    %26 = vector.shape_cast %23 : vector<4x1x128xf32> to vector<4x1x1x128xf32>
    tpu.vector_store %arg2[%c0_13, %c0_14, %c16, %c0_15], %26 {strides = array<i32>} : memref<4x1x17x128xf32, #tpu.memory_space<vmem>>, vector<4x1x1x128xf32>,
    return
  }
  func.func @transform_0(%arg0: i32) -> (i32, i32, i32, i32) {
    %c0_i32 = arith.constant 0 : i32
    %c0_i32_0 = arith.constant 0 : i32
    %c0_i32_1 = arith.constant 0 : i32
    %c0_i32_2 = arith.constant 0 : i32
    return %c0_i32, %arg0, %c0_i32_0, %c0_i32_1 : i32, i32, i32, i32
  }
  func.func @transform_1(%arg0: i32) -> (i32, i32, i32, i32) {
    %c0_i32 = arith.constant 0 : i32
    %c0_i32_0 = arith.constant 0 : i32
    %c0_i32_1 = arith.constant 0 : i32
    %c0_i32_2 = arith.constant 0 : i32
    return %c0_i32, %arg0, %c0_i32_0, %c0_i32_1 : i32, i32, i32, i32
  }
}

</mosaic_0001>

<llo_original>
// kernel: tpu_custom_call.1
$region0: #{tpu_custom_call.1}
  #allocation0 [shape = 'u32[]', space=smem, size = 0x4, offset = 0x4, fixed_abs, tag = 'smem constant byte address 0x4 - core index']
  #allocation1 [shape = 'u32[144,128]{1,0:T(1,128)}', space=vmem, size = 0x12000, scoped, tag = 'internal scratch']
  #allocation5 [shape = 's32[]', space=sflag, size = 0x4, offset = 0, fixed_abs, tag = 'sflag constant byte address 0x0 - dummy sync flag']
  %s0 = inlined_call_operand.hbm [shape: f32[4,2,16,128], index: 0, kind: input, shape index: {}]
  %s1 = inlined_call_operand.vmem [shape: f32[4,2,17,128], index: 1, kind: output, shape index: {}]
  %s2 = sld [smem:[#allocation0]]
  $region75: #{tpu_custom_call.1} parent=0
    _
  %s4 = ssub.s32 1, %s2
  %s5 = scalar_select 0, %s4, %s2
  $region1: #{tpu_custom_call.1} parent=0
    #allocation2 [shape = 'u8[65536]{0}', space=vmem, size = 0x10000, scoped, tag = 'input window, operand 0']
    #allocation3 [shape = 's32[2]{0}', space=sflag, size = 0x8, scoped, tag = 'scoped memory for tpu_custom_call.1']
    #allocation4 [shape = 'u8[98304]{0}', space=vmem, size = 0x18000, scoped, tag = 'output window, operand 0']
    %6 = vsyncpa [#allocation3], 0
    %s7 = scalar_lea.sflag [#allocation3], 1
    %8 = vsyncpa %s7, 0
    loop: start=0, step=1, limit=4
    $region2: #{tpu_custom_call.1} parent=1 // loop_pre_header
      _
    $region3: #{tpu_custom_call.1} parent=1 // loop_header
      %s10 = sphi 0, %s14
      %p11 = scmp.ge.s32.totalorder %s10, 4
      %s20 = sphi 0, %s22
      %s23 = sphi 0, %s20
      %s24 = sphi 0, %s23
      %s40 = sphi 0, %s24
      %s46 = sphi 0, %s48
      %s49 = sphi 0, %s46
      %s50 = sphi 0, %s49
      %s66 = sphi 0, %s50
    $region4: #{tpu_custom_call.1} parent=1 // loop_header_branch
      %13 = sbr.rel (%p11) target = $region8
    $region5: #{tpu_custom_call.1} parent=1 // loop_body
      %s15 = ssub.s32 %s10, 1
      %s16 = ssub.s32 %s10, 2
      %s17 = sadd.s32 %s10, 1
      %s18 = ssub.s32 %s10, %s17
      %p19 = scmp.eq.s32.totalorder %s18, 0
      %s21 = sadd.s32 %s20, 1
      %s22 = scalar_select %p19, %s20, %s21
      %p25 = pneg %p19
      %p26 = scmp.eq.s32.totalorder %s10, 1
      %p27 = por %p25, %p26
      %p28 = scmp.ne.s32.totalorder %s20, %s23
      %p29 = scmp.eq.s32.totalorder %s10, 0
      %p30 = por %p28, %p29
      %p31 = scmp.ne.s32.totalorder %s20, %s23
      %p32 = scmp.eq.s32.totalorder %s15, 1
      %p33 = por %p31, %p32
      %p34 = scmp.ne.s32.totalorder %s23, %s24
      %p35 = scmp.eq.s32.totalorder %s15, 0
      %p36 = por %p34, %p35
      %p37 = scmp.ne.s32.totalorder %s23, %s24
      %p38 = scmp.eq.s32.totalorder %s16, 1
      %p39 = por %p37, %p38
      %p41 = scmp.ne.s32.totalorder %s24, %s40
      %p42 = scmp.eq.s32.totalorder %s16, 0
      %p43 = por %p41, %p42
      %s44 = ssub.s32 %s10, %s17
      %p45 = scmp.eq.s32.totalorder %s44, 0
      %s47 = sadd.s32 %s46, 1
      %s48 = scalar_select %p45, %s46, %s47
      %p51 = pneg %p45
      %p52 = scmp.eq.s32.totalorder %s10, 1
      %p53 = por %p51, %p52
      %p54 = scmp.ne.s32.totalorder %s46, %s49
      %p55 = scmp.eq.s32.totalorder %s10, 0
      %p56 = por %p54, %p55
      %p57 = scmp.ne.s32.totalorder %s46, %s49
      %p58 = scmp.eq.s32.totalorder %s15, 1
      %p59 = por %p57, %p58
      %p60 = scmp.ne.s32.totalorder %s49, %s50
      %p61 = scmp.eq.s32.totalorder %s15, 0
      %p62 = por %p60, %p61
      %p63 = scmp.ne.s32.totalorder %s49, %s50
      %p64 = scmp.eq.s32.totalorder %s16, 1
      %p65 = por %p63, %p64
      %p67 = scmp.ne.s32.totalorder %s50, %s66
      %p68 = scmp.eq.s32.totalorder %s16, 0
      %p69 = por %p67, %p68
      %p70 = scmp.le.s32.totalorder 1, %s10
      %p71 = scmp.lt.s32.totalorder %s10, 3
      %p72 = pnand %p70, %p71
      %p73 = pneg %p72
      // Predicated region
      $region9: #{tpu_custom_call.1} parent=5 // pred_check
        _
      $region10: #{tpu_custom_call.1} parent=5 // pred_check_branch
        %75 = sbr.rel (%p72) target = $region12
      $region11: #{tpu_custom_call.1} parent=5 // pred_region
        %s76 = ssub.s32 %s10, 1
      $region12: #{tpu_custom_call.1} parent=5 // pred_fallthru
        _
      %p77 = scmp.lt.s32.totalorder %s10, 2
      // Predicated region
      $region13: #{tpu_custom_call.1} parent=5 // pred_check
        %p78 = pneg %p77
      $region14: #{tpu_custom_call.1} parent=5 // pred_check_branch
        %80 = sbr.rel (%p78) target = $region16
      $region15: #{tpu_custom_call.1} parent=5 // pred_region
        // Predicated region
        $region17: #{tpu_custom_call.1} parent=15 // pred_check
          %p81 = pneg %p30
        $region18: #{tpu_custom_call.1} parent=15 // pred_check_branch
          %83 = sbr.rel (%p81) target = $region20
        $region19: #{tpu_custom_call.1} parent=15 // pred_region
          #allocation6 [shape = 'u32[6]{0}', space=smem, size = 0x18, scoped, tag = 'DMA stride descriptor']
          %s84 = sand.u32 %s20, 1
          %s85 = scalar_lea.sflag [#allocation3], %s84
          %s86 = sand.u32 %s20, 1
          %s87 = smul.addr %s86, 64
          %s88 = scalar_lea.vmem [#allocation2], %s87
          %s90 = ssub.s32 1024, 1024
          %91 = vsyncadd %s85, %s90
          %s92 = smul.addr %s10, 2
          %s93 = smul.addr %s92, 128
          %s94 = scalar_lea.hbm %s0, %s93
          %s96 = sshll.u32 1, 14
          %s97 = sxor.u32 4294967295, %s96
          %s99 = sld [smem:[#allocation0]]
          %s100 = sadd.s32 2, %s99
          %s102 = sshll.u32 7, 26
          %s103 = sxor.u32 4294967295, %s102
          %s104 = sand.u32 0, %s103
          %s105 = sshll.u32 %s100, 26
          %s106 = sor.u32 %s104, %s105
          %s107 = sshll.u32 %s88, 4
          %s108 = int_to_ptr.vmem [resolvable:$true] %s107
          %114 = sst [smem:[#allocation6]] 512
          %s115 = scalar_lea.smem [#allocation6], 1
          %116 = sst [smem:[%s115]] 256
          %s117 = scalar_lea.smem [#allocation6], 2
          %118 = sst [smem:[%s117]] 2
          %s119 = scalar_lea.smem [#allocation6], 3
          %120 = sst [smem:[%s119]] 128
          %s121 = scalar_lea.smem [#allocation6], 4
          %122 = sst [smem:[%s121]] 128
          %s123 = scalar_lea.smem [#allocation6], 5
          %124 = sst [smem:[%s123]] 8
          %126 = dma.general %s94, 1024, %s108, %s85, [#allocation5], [#allocation6], %s106, 0
        $region20: #{tpu_custom_call.1} parent=15 // pred_fallthru
          _
      $region16: #{tpu_custom_call.1} parent=5 // pred_fallthru
        _
      %p127 = scmp.le.s32.totalorder 1, %s10
      %p128 = scmp.lt.s32.totalorder %s10, 3
      %p129 = pnand %p127, %p128
      %p130 = pneg %p129
      // Predicated region
      $region21: #{tpu_custom_call.1} parent=5 // pred_check
        _
      $region22: #{tpu_custom_call.1} parent=5 // pred_check_branch
        %132 = sbr.rel (%p129) target = $region24
      $region23: #{tpu_custom_call.1} parent=5 // pred_region
        %s133 = ssub.s32 %s10, 1
        %s134 = sand.u32 %s23, 1
        %s135 = scalar_lea.sflag [#allocation3], %s134
        %s136 = sand.u32 %s23, 1
        %s137 = smul.addr %s136, 64
        %s138 = scalar_lea.vmem [#allocation2], %s137
        // Predicated region
        $region25: #{tpu_custom_call.1} parent=23 // pred_check
          %p139 = pneg %p36
        $region26: #{tpu_custom_call.1} parent=23 // pred_check_branch
          %141 = sbr.rel (%p139) target = $region28
        $region27: #{tpu_custom_call.1} parent=23 // pred_region
          %142 = dma.done %s135, 1024
        $region28: #{tpu_custom_call.1} parent=23 // pred_fallthru
          _
        %s143 = sand.u32 %s23, 1
        %s144 = scalar_lea.sflag [#allocation3], %s143
        %s145 = sand.u32 %s23, 1
        %s146 = smul.addr %s145, 64
        %s147 = scalar_lea.vmem [#allocation2], %s146
        %p148 = pneg %p36
        %p149 = pneg %p33
        %p150 = pneg %p62
        %p151 = pneg %p59
        %s152 = sand.u32 %s49, 1
        %s153 = sand.u32 %s49, 1
        %s154 = smul.addr %s153, 96
        %s155 = scalar_lea.vmem [#allocation4], %s154
        %v156 = vld [vmem:[%s138] sm:$0xff]
        %v157 = vld [vmem:[%s138 + $0x8] sm:$0xff]
        %v158 = vld [vmem:[%s138 + $0x10] sm:$0xff]
        %v159 = vld [vmem:[%s138 + $0x18] sm:$0xff]
        %v160 = vld [vmem:[%s138 + $0x20] sm:$0xff]
        %v161 = vld [vmem:[%s138 + $0x28] sm:$0xff]
        %v162 = vld [vmem:[%s138 + $0x30] sm:$0xff]
        %v163 = vld [vmem:[%s138 + $0x38] sm:$0xff]
        %164 = vst [vmem:[%s155] sm:$0xff] %v156
        %165 = vst [vmem:[%s155 + $0x8] sm:$0xff] %v157
        %166 = vst [vmem:[%s155 + $0x18] sm:$0xff] %v158
        %167 = vst [vmem:[%s155 + $0x20] sm:$0xff] %v159
        %168 = vst [vmem:[%s155 + $0x30] sm:$0xff] %v160
        %169 = vst [vmem:[%s155 + $0x38] sm:$0xff] %v161
        %170 = vst [vmem:[%s155 + $0x48] sm:$0xff] %v162
        %171 = vst [vmem:[%s155 + $0x50] sm:$0xff] %v163
        %v172 = vadd.f32 %v156, %v158
        %v173 = vadd.f32 %v172, %v160
        %v174 = vadd.f32 %v173, %v162
        %v175 = vadd.f32 %v157, %v159
        %v176 = vadd.f32 %v175, %v161
        %v177 = vadd.f32 %v176, %v163
        %v178 = vrcp.pop 4.0
        %v179 = vmul.f32 %v174, %v178
        %v180 = vmul.f32 %v177, %v178
        %v181 = vsub.f32 %v156, %v179
        %v182 = vsub.f32 %v157, %v180
        %v183 = vsub.f32 %v158, %v179
        %v184 = vsub.f32 %v159, %v180
        %v185 = vsub.f32 %v160, %v179
        %v186 = vsub.f32 %v161, %v180
        %v187 = vsub.f32 %v162, %v179
        %v188 = vsub.f32 %v163, %v180
        %v189 = vmul.f32 %v181, %v181
        %v190 = vmul.f32 %v182, %v182
        %v191 = vmul.f32 %v183, %v183
        %v192 = vmul.f32 %v184, %v184
        %v193 = vmul.f32 %v185, %v185
        %v194 = vmul.f32 %v186, %v186
        %v195 = vmul.f32 %v187, %v187
        %v196 = vmul.f32 %v188, %v188
        %v197 = vadd.f32 %v189, %v191
        %v198 = vadd.f32 %v197, %v193
        %v199 = vadd.f32 %v198, %v195
        %v200 = vadd.f32 %v190, %v192
        %v201 = vadd.f32 %v200, %v194
        %v202 = vadd.f32 %v201, %v196
        %v203 = vmul.f32 %v199, %v178
        %v204 = vmul.f32 %v202, %v178
        %v205 = vadd.f32 %v203, 1e-08
        %v206 = vadd.f32 %v204, 1e-08
        %v207 = vrsqrt.pop %v205
        %v208 = vmul.f32 %v205, %v207
        %vm209 = vcmp.eq.f32.partialorder %v205, inf
        %v210 = vsel %vm209, %v205, %v208
        %vm211 = vcmp.eq.f32.partialorder %v205, 0.0
        %v212 = vand.u32 %v205, 2147483648
        %v213 = vsel %vm211, %v212, %v210
        %v214 = vrsqrt.pop %v206
        %v215 = vmul.f32 %v206, %v214
        %vm216 = vcmp.eq.f32.partialorder %v206, inf
        %v217 = vsel %vm216, %v206, %v215
        %vm218 = vcmp.eq.f32.partialorder %v206, 0.0
        %v219 = vand.u32 %v206, 2147483648
        %v220 = vsel %vm218, %v219, %v217
        %v221 = vadd.f32 %v213, %v220
        %222 = vadd.xlane.f32.xlu0 %v221
        %v223 = vpop.xlane.xlu0 %222
        %v224 = vrot.slane %v223, 4
        %v225 = vadd.f32 %v223, %v224
        %v226 = vrot.slane %v225, 2
        %v227 = vadd.f32 %v225, %v226
        %v228 = vrot.slane %v227, 1
        %v229 = vadd.f32 %v227, %v228
        %s230 = vtos %v229
        %v231 = vrcp.pop 2048.0
        %s232 = vtos %v231
        %s233 = smul.f32 %s230, %s232
        %v234 = vstv %s233
        %235 = vst [vmem:[%s155 + $0x10] sm:$0x1] %v234
        %236 = vst [vmem:[%s155 + $0x28] sm:$0x1] %v234
        %237 = vst [vmem:[%s155 + $0x40] sm:$0x1] %v234
        %238 = vst [vmem:[%s155 + $0x58] sm:$0x1] %v234
        %s239 = sand.u32 %s49, 1
        %s240 = sand.u32 %s49, 1
        %s241 = smul.addr %s240, 96
        %s242 = scalar_lea.vmem [#allocation4], %s241
        // Predicated region
        $region29: #{tpu_custom_call.1} parent=23 // pred_check
          %p243 = pneg %p59
        $region30: #{tpu_custom_call.1} parent=23 // pred_check_branch
          %245 = sbr.rel (%p243) target = $region32
        $region31: #{tpu_custom_call.1} parent=23 // pred_region
          %s246 = smul.addr %s15, 3
          %s247 = smul.addr %s246, 8
          %s248 = scalar_lea.vmem %s1, %s247
          // Predicated region
          $region33: #{tpu_custom_call.1} parent=31 // pred_check
            _
          $region34: #{tpu_custom_call.1} parent=31 // pred_check_branch
            %250 = sbr.rel (0) target = $region36
          $region35: #{tpu_custom_call.1} parent=31 // pred_region
            // Predicated region
            $region37: #{tpu_custom_call.1} parent=35 // pred_check
              _
            $region38: #{tpu_custom_call.1} parent=35 // pred_check_branch
              %252 = sbr.rel (0) target = $region40
            $region39: #{tpu_custom_call.1} parent=35 // pred_region
              // Predicated region
              $region52: #{tpu_custom_call.1} parent=39 // pred_check
                _
              $region53: #{tpu_custom_call.1} parent=39 // pred_check_branch
                %289 = sbr.rel (0) target = $region55
              $region54: #{tpu_custom_call.1} parent=39 // pred_region
                loop: start=0, step=1, limit=1
                $region56: #{tpu_custom_call.1} parent=54 // loop_pre_header
                  _
                $region57: #{tpu_custom_call.1} parent=54 // loop_header
                  %s291 = sphi 0, %s295
                  %p292 = scmp.ge.s32.totalorder %s291, 1
                  %s296 = sphi %s242, %s242
                  %s297 = sphi %s248, %s248
                $region58: #{tpu_custom_call.1} parent=54 // loop_header_branch
                  %294 = sbr.rel (%p292) target = $region62
                $region59: #{tpu_custom_call.1} parent=54 // loop_body
                  %v298 = vld [vmem:[%s296] sm:$0xff]
                  %299 = vst [vmem:[%s297] sm:$0xff] %v298
                  %v300 = vld [vmem:[%s296 + $0x8] sm:$0xff]
                  %301 = vst [vmem:[%s297 + $0x8] sm:$0xff] %v300
                  %v302 = vld [vmem:[%s296 + $0x10] sm:$0xff]
                  %303 = vst [vmem:[%s297 + $0x10] sm:$0xff] %v302
                  %v304 = vld [vmem:[%s296 + $0x18] sm:$0xff]
                  %305 = vst [vmem:[%s297 + $0x30] sm:$0xff] %v304
                  %v306 = vld [vmem:[%s296 + $0x20] sm:$0xff]
                  %307 = vst [vmem:[%s297 + $0x38] sm:$0xff] %v306
                  %v308 = vld [vmem:[%s296 + $0x28] sm:$0xff]
                  %309 = vst [vmem:[%s297 + $0x40] sm:$0xff] %v308
                  %v310 = vld [vmem:[%s296 + $0x30] sm:$0xff]
                  %311 = vst [vmem:[%s297 + $0x60] sm:$0xff] %v310
                  %v312 = vld [vmem:[%s296 + $0x38] sm:$0xff]
                  %313 = vst [vmem:[%s297 + $0x68] sm:$0xff] %v312
                  %v314 = vld [vmem:[%s296 + $0x40] sm:$0xff]
                  %315 = vst [vmem:[%s297 + $0x70] sm:$0xff] %v314
                  %v316 = vld [vmem:[%s296 + $0x48] sm:$0xff]
                  %317 = vst [vmem:[%s297 + $0x90] sm:$0xff] %v316
                  %v318 = vld [vmem:[%s296 + $0x50] sm:$0xff]
                  %319 = vst [vmem:[%s297 + $0x98] sm:$0xff] %v318
                  %v320 = vld [vmem:[%s296 + $0x58] sm:$0xff]
                  %321 = vst [vmem:[%s297 + $0xa0] sm:$0xff] %v320
                $region60: #{tpu_custom_call.1} parent=54 // loop_footer
                  %s295 = sadd.s32 1, %s291
                $region61: #{tpu_custom_call.1} parent=54 // loop_footer_branch
                  %290 = sbr.rel target = $region57
                $region62: #{tpu_custom_call.1} parent=54 // loop_exit
                  _
              $region55: #{tpu_custom_call.1} parent=39 // pred_fallthru
                _
              // Predicated region
              $region63: #{tpu_custom_call.1} parent=39 // pred_check
                _
              $region64: #{tpu_custom_call.1} parent=39 // pred_check_branch
                %323 = sbr.rel target = $region66
              $region65: #{tpu_custom_call.1} parent=39 // pred_region
                _
              $region66: #{tpu_custom_call.1} parent=39 // pred_fallthru
                _
            $region40: #{tpu_custom_call.1} parent=35 // pred_fallthru
              _
            // Predicated region
            $region41: #{tpu_custom_call.1} parent=35 // pred_check
              _
            $region42: #{tpu_custom_call.1} parent=35 // pred_check_branch
              %254 = sbr.rel target = $region44
            $region43: #{tpu_custom_call.1} parent=35 // pred_region
              loop: start=0, step=1, limit=1
              $region45: #{tpu_custom_call.1} parent=43 // loop_pre_header
                _
              $region46: #{tpu_custom_call.1} parent=43 // loop_header
                %s257 = sphi 0, %s261
                %p258 = scmp.ge.s32.totalorder %s257, 1
                %s262 = sphi %s242, %s242
                %s263 = sphi %s248, %s248
              $region47: #{tpu_custom_call.1} parent=43 // loop_header_branch
                %260 = sbr.rel (%p258) target = $region51
              $region48: #{tpu_custom_call.1} parent=43 // loop_body
                %v264 = vld [vmem:[%s262] sm:$0xff]
                %265 = vst [vmem:[%s263] sm:$0xff] %v264
                %v266 = vld [vmem:[%s262 + $0x8] sm:$0xff]
                %267 = vst [vmem:[%s263 + $0x8] sm:$0xff] %v266
                %v268 = vld [vmem:[%s262 + $0x10] sm:$0xff]
                %269 = vst [vmem:[%s263 + $0x10] sm:$0xff] %v268
                %v270 = vld [vmem:[%s262 + $0x18] sm:$0xff]
                %271 = vst [vmem:[%s263 + $0x30] sm:$0xff] %v270
                %v272 = vld [vmem:[%s262 + $0x20] sm:$0xff]
                %273 = vst [vmem:[%s263 + $0x38] sm:$0xff] %v272
                %v274 = vld [vmem:[%s262 + $0x28] sm:$0xff]
                %275 = vst [vmem:[%s263 + $0x40] sm:$0xff] %v274
                %v276 = vld [vmem:[%s262 + $0x30] sm:$0xff]
                %277 = vst [vmem:[%s263 + $0x60] sm:$0xff] %v276
                %v278 = vld [vmem:[%s262 + $0x38] sm:$0xff]
                %279 = vst [vmem:[%s263 + $0x68] sm:$0xff] %v278
                %v280 = vld [vmem:[%s262 + $0x40] sm:$0xff]
                %281 = vst [vmem:[%s263 + $0x70] sm:$0xff] %v280
                %v282 = vld [vmem:[%s262 + $0x48] sm:$0xff]
                %283 = vst [vmem:[%s263 + $0x90] sm:$0xff] %v282
                %v284 = vld [vmem:[%s262 + $0x50] sm:$0xff]
                %285 = vst [vmem:[%s263 + $0x98] sm:$0xff] %v284
                %v286 = vld [vmem:[%s262 + $0x58] sm:$0xff]
                %287 = vst [vmem:[%s263 + $0xa0] sm:$0xff] %v286
              $region49: #{tpu_custom_call.1} parent=43 // loop_footer
                %s261 = sadd.s32 1, %s257
              $region50: #{tpu_custom_call.1} parent=43 // loop_footer_branch
                %256 = sbr.rel target = $region46
              $region51: #{tpu_custom_call.1} parent=43 // loop_exit
                _
            $region44: #{tpu_custom_call.1} parent=35 // pred_fallthru
              _
          $region36: #{tpu_custom_call.1} parent=31 // pred_fallthru
            _
          %324 = vnop
        $region32: #{tpu_custom_call.1} parent=23 // pred_fallthru
          _
      $region24: #{tpu_custom_call.1} parent=5 // pred_fallthru
        _
      %p325 = scmp.le.s32.totalorder 2, %s10
      // Predicated region
      $region67: #{tpu_custom_call.1} parent=5 // pred_check
        %p326 = pneg %p325
      $region68: #{tpu_custom_call.1} parent=5 // pred_check_branch
        %328 = sbr.rel (%p326) target = $region70
      $region69: #{tpu_custom_call.1} parent=5 // pred_region
        %s329 = ssub.s32 %s10, 2
        // Predicated region
        $region71: #{tpu_custom_call.1} parent=69 // pred_check
          %p330 = pneg %p65
        $region72: #{tpu_custom_call.1} parent=69 // pred_check_branch
          %332 = sbr.rel (%p330) target = $region74
        $region73: #{tpu_custom_call.1} parent=69 // pred_region
          %s333 = sand.u32 %s50, 1
          %s334 = sand.u32 %s50, 1
          %s335 = smul.addr %s334, 96
          %s336 = scalar_lea.vmem [#allocation4], %s335
        $region74: #{tpu_custom_call.1} parent=69 // pred_fallthru
          _
      $region70: #{tpu_custom_call.1} parent=5 // pred_fallthru
        _
    $region6: #{tpu_custom_call.1} parent=1 // loop_footer
      %s14 = sadd.s32 1, %s10
    $region7: #{tpu_custom_call.1} parent=1 // loop_footer_branch
      %9 = sbr.rel target = $region3
    $region8: #{tpu_custom_call.1} parent=1 // loop_exit
      _
    %337 = vsyncpa [#allocation3], 1
    %s338 = scalar_lea.sflag [#allocation3], 1
    %339 = vsyncpa %s338, 1

</llo_original>
